<compile_context>
chip_gen: v6e
topology: v6e:2x2x1
jax: 0.10.0
libtpu: 0.0.40
codegen_flags: <defaults>
</compile_context>

<pallas_src>
import functools

import jax
import jax.numpy as jnp
from jax.experimental import pallas as pl
from jax.experimental.pallas import tpu as pltpu


_BN_EPS = 1e-5


def _get_activation(name):
    name = (name or "relu").lower()
    if name == "gelu":
        return jax.nn.gelu
    if name == "selu":
        return jax.nn.selu
    if name == "silu":
        return jax.nn.silu
    if name == "hardswish":
        return jax.nn.hard_swish
    if name == "leakyrelu":
        return lambda v: jax.nn.leaky_relu(v, negative_slope=0.01)
    if name == "leakyrelu0.2":
        return lambda v: jax.nn.leaky_relu(v, negative_slope=0.2)
    if name == "rrelu":
        # TODO(synk): RReLU samples a random slope in training; eval-mode mean slope used.
        return lambda v: jax.nn.leaky_relu(v, negative_slope=(1.0 / 8.0 + 1.0 / 3.0) / 2.0)
    return lambda v: jnp.maximum(v, 0.0)  # relu (default)


def _fold_bn(conv_w, conv_b, gamma, beta, mean, var, eps=_BN_EPS):
    """Fold inference-mode BatchNorm1d into the preceding 1x1 Conv1d.

    conv_w: [C_out, C_in], conv_b: [C_out].
    Returns Wf [C_out, C_in] (ready for `Wf @ x`) and bf [C_out].
    """
    scale = gamma / jnp.sqrt(var + eps)          # [C_out]
    w = conv_w * scale[:, None]                  # [C_out, C_in]
    b = (conv_b - mean) * scale + beta           # [C_out]
    return w, b


# ----------------------------------------------------------------------------
# Pallas kernel: fused (conv1+bn1+act) -> (conv2+bn2) -> +residual -> act
# on one (C, tn) point tile of a single batch element.
# ----------------------------------------------------------------------------
def _res_block_kernel(x_ref, w1_ref, b1_ref, w2_ref, b2_ref, o_ref, *, act):
    x = x_ref[...]                                        # (C, tn) f32
    xb = x.astype(jnp.bfloat16)                           # MXU operand
    # conv1 + bn1 (folded) + act   -- MXU, f32 accumulate
    h = jnp.dot(w1_ref[...], xb, preferred_element_type=jnp.float32)   # (Cm, tn)
    h = act(h + b1_ref[...])                              # bias/act in f32
    # conv2 + bn2 (folded) + residual + act
    y = jnp.dot(w2_ref[...], h.astype(jnp.bfloat16),
                preferred_element_type=jnp.float32)                     # (C, tn)
    y = y + b2_ref[...] + x                               # residual add in f32
    o_ref[...] = act(y).astype(o_ref.dtype)


def _vmem_budget_bytes():
    """Per-generation VMEM request: ~3/4 of physical, capped at 96 MiB."""
    try:
        cap = int(pltpu.get_tpu_info().vmem_capacity_bytes)
    except Exception:
        cap = 128 << 20
    # v7x (64 MiB physical) -> 48 MiB; v5e/v6e (128 MiB) -> 96 MiB.
    return max(min(cap * 3 // 4, 96 << 20), 16 << 20)


def _pick_tile_n(N, C, C_mid, vmem_limit):
    """Point-axis tile sized from the VMEM budget, rounded to 256 (>=128)."""
    # f32 bytes per point-column across double-buffered in/out tiles + h scratch
    per_col = 4 * (2 * C + 2 * C + 2 * C_mid)
    weight_bytes = 2 * (C * C_mid + C_mid * C) + 4 * (C_mid + C)   # bf16 W, f32 b
    budget = max(vmem_limit // 2 - 2 * weight_bytes, 1 << 20)
    tn = min(budget // per_col, 2048)
    if tn >= 256:
        tn = (tn // 256) * 256
    else:
        tn = max(128, (tn // 128) * 128)
    if N <= tn:
        tn = max(128, int(pl.cdiv(N, 128)) * 128)   # single lane-dense block
    return int(tn)


def conv_bn_relu_res1d_forward(x_bcn, w1f, b1f, w2f, b2f, *, activation="relu",
                               tile_n=None):
    """x_bcn: [B, C, N] (PyTorch Conv1d layout). Returns [B, C, N] float32.

    w1f: [C_mid, C], b1f: [C_mid], w2f: [C, C_mid], b2f: [C]  (BN-folded).
    """
    B, C, N = x_bcn.shape
    C_mid = w1f.shape[0]
    act = _get_activation(activation)

    vmem_limit = _vmem_budget_bytes()
    tn = _pick_tile_n(N, C, C_mid, vmem_limit) if tile_n is None else int(tile_n)
    n_pad = int(pl.cdiv(N, tn)) * tn

    x = x_bcn.astype(jnp.float32)
    if n_pad != N:
        # Padded point columns compute act(b)-style garbage; sliced off below.
        x = jnp.pad(x, ((0, 0), (0, 0), (0, n_pad - N)))

    # bf16 MXU operands (halves resident weight VMEM); biases stay f32.
    w1b = w1f.astype(jnp.bfloat16)                      # [C_mid, C]
    w2b = w2f.astype(jnp.bfloat16)                      # [C, C_mid]
    b1c = b1f.reshape(C_mid, 1).astype(jnp.float32)
    b2c = b2f.reshape(C, 1).astype(jnp.float32)

    # NOTE(v7x): keep B * (n_pad // tn) >= 2 so both TensorCores get work.
    grid = (B, n_pad // tn)

    cost = pl.CostEstimate(
        flops=2 * B * n_pad * (C * C_mid + C_mid * C),
        transcendentals=0,
        bytes_accessed=2 * B * n_pad * C * 4
        + 2 * (C * C_mid + C_mid * C) + 4 * (C_mid + C),
    )

    x_spec = pl.BlockSpec((None, C, tn), lambda b, j: (b, 0, j))
    out_spec = pl.BlockSpec((None, C, tn), lambda b, j: (b, 0, j))

    def _run(single_buffer_weights):
        const_map = lambda b, j: (0, 0)
        if single_buffer_weights and hasattr(pl, "Buffered"):
            # Constant-index operands never re-DMA; single-buffer them to save VMEM.
            mk = lambda shape: pl.BlockSpec(shape, const_map,
                                            pipeline_mode=pl.Buffered(1))
        else:
            mk = lambda shape: pl.BlockSpec(shape, const_map)
        return pl.pallas_call(
            functools.partial(_res_block_kernel, act=act),
            out_shape=jax.ShapeDtypeStruct((B, C, n_pad), jnp.float32),
            grid=grid,
            in_specs=[
                x_spec,                 # x point tile (lane-dense)
                mk((C_mid, C)),         # W1f (resident)
                mk((C_mid, 1)),         # b1f (resident)
                mk((C, C_mid)),         # W2f (resident)
                mk((C, 1)),             # b2f (resident)
            ],
            out_specs=out_spec,
            compiler_params=pltpu.CompilerParams(
                dimension_semantics=("parallel", "parallel"),
                vmem_limit_bytes=vmem_limit,
            ),
            cost_estimate=cost,
        )(x, w1b, b1c, w2b, b2c)

    try:
        out = _run(True)
    except Exception:
        # Fall back if pipeline_mode=pl.Buffered(1) is not supported here.
        out = _run(False)

    if n_pad != N:
        out = out[:, :, :N]
    return out


class ConvBNReLURes1DPallas:
    """Inference-mode ConvBNReLURes1D (kernel_size=1, groups=1), BN folded into convs."""

    def __init__(self, channels, kernel_size=1, bias=True, activation="relu",
                 groups=1, res_expansion=1.0, *, key=None):
        assert kernel_size == 1, "pointMLP uses kernel_size=1 (pointwise conv)"
        # TODO(synk): groups > 1 branch (grouped convs + extra conv in net2) not implemented.
        assert groups == 1
        self.activation = activation
        self.channels = channels
        self.c_mid = int(channels * res_expansion)
        key = jax.random.PRNGKey(0) if key is None else key
        ks = jax.random.split(key, 12)
        C, Cm = channels, self.c_mid
        f = lambda k, s: jax.random.normal(k, s, jnp.float32) * 0.1
        # raw (unfolded) params, PyTorch shapes with the kernel_size=1 dim squeezed
        self.conv1_w = f(ks[0], (Cm, C))
        self.conv1_b = f(ks[1], (Cm,))
        self.conv2_w = f(ks[2], (C, Cm))
        self.conv2_b = f(ks[3], (C,))
        self.bn1_gamma = 1.0 + 0.1 * jax.random.normal(ks[4], (Cm,), jnp.float32)
        self.bn1_beta = f(ks[5], (Cm,))
        self.bn1_mean = f(ks[6], (Cm,))
        self.bn1_var = jnp.abs(jax.random.normal(ks[7], (Cm,), jnp.float32)) + 0.5
        self.bn2_gamma = 1.0 + 0.1 * jax.random.normal(ks[8], (C,), jnp.float32)
        self.bn2_beta = f(ks[9], (C,))
        self.bn2_mean = f(ks[10], (C,))
        self.bn2_var = jnp.abs(jax.random.normal(ks[11], (C,), jnp.float32)) + 0.5
        # TODO(synk): training-mode BatchNorm (per-batch statistics) is not fused;
        # this implements the inference forward with running statistics folded in.
        self.w1, self.b1 = _fold_bn(self.conv1_w, self.conv1_b, self.bn1_gamma,
                                    self.bn1_beta, self.bn1_mean, self.bn1_var)
        self.w2, self.b2 = _fold_bn(self.conv2_w, self.conv2_b, self.bn2_gamma,
                                    self.bn2_beta, self.bn2_mean, self.bn2_var)

    def __call__(self, x_bcn, *, tile_n=None):
        return conv_bn_relu_res1d_forward(x_bcn, self.w1, self.b1, self.w2,
                                          self.b2, activation=self.activation,
                                          tile_n=tile_n)


if __name__ == "__main__":
    B, C, N = 2, 32, 256          # batch, channels, points (small demo shapes)
    key = jax.random.PRNGKey(0)
    kx, kp = jax.random.split(key)
    x = jax.random.normal(kx, (B, C, N), jnp.float32)

    block = ConvBNReLURes1DPallas(channels=C, kernel_size=1, bias=True,
                                  activation="relu", groups=1,
                                  res_expansion=1.0, key=kp)
    y = block(x)
    jax.block_until_ready(y)
    assert y.shape == (B, C, N)

    # pure-JAX f32 reference with UNFOLDED params (layer-by-layer, eval-mode BN)
    def ref_forward(v):
        def conv1x1(u, w, b):
            return jnp.einsum("oc,bcn->bon", w, u) + b[None, :, None]

        def bn(u, g, be, m, var):
            s = g / jnp.sqrt(var + _BN_EPS)
            return (u - m[None, :, None]) * s[None, :, None] + be[None, :, None]

        h = jnp.maximum(bn(conv1x1(v, block.conv1_w, block.conv1_b),
                           block.bn1_gamma, block.bn1_beta,
                           block.bn1_mean, block.bn1_var), 0.0)
        z = bn(conv1x1(h, block.conv2_w, block.conv2_b),
               block.bn2_gamma, block.bn2_beta, block.bn2_mean, block.bn2_var)
        return jnp.maximum(z + v, 0.0)

    y_ref = ref_forward(x)
    max_err = float(jnp.max(jnp.abs(y - y_ref)))
    # Tolerance relaxed vs. the f32 reference because the kernel feeds bf16
    # operands to the MXU (accumulation, bias, residual and activation are f32).
    assert jnp.allclose(y, y_ref, atol=5e-2, rtol=5e-2), f"mismatch {max_err}"

    print("KERNEL_OK")
</pallas_src>

<mosaic_0001>
module attributes {stable_mosaic.version = 11 : i64} {
  func.func @_res_block_kernel(%arg0: i32, %arg1: i32, %arg2: memref<1x32x256xf32, #tpu.memory_space<vmem>>, %arg3: memref<32x32xbf16, #tpu.memory_space<vmem>>, %arg4: memref<32x1xf32, #tpu.memory_space<vmem>>, %arg5: memref<32x32xbf16, #tpu.memory_space<vmem>>, %arg6: memref<32x1xf32, #tpu.memory_space<vmem>>, %arg7: memref<1x32x256xf32, #tpu.memory_space<vmem>>) attributes {dimension_semantics = [#tpu.dimension_semantics<parallel>, #tpu.dimension_semantics<parallel>], iteration_bounds = array<i64: 2, 1>, scalar_prefetch = 0 : i64, scratch_operands = 0 : i64, tpu.core_type = #tpu.core_type<tc>, window_params = [{transform_indices = @transform_0, window_bounds = array<i64: 1, 32, 256>}, {pipeline_mode = #tpu.pipeline_mode<synchronous>, transform_indices = @transform_1, window_bounds = array<i64: 32, 32>}, {pipeline_mode = #tpu.pipeline_mode<synchronous>, transform_indices = @transform_2, window_bounds = array<i64: 32, 1>}, {pipeline_mode = #tpu.pipeline_mode<synchronous>, transform_indices = @transform_3, window_bounds = array<i64: 32, 32>}, {pipeline_mode = #tpu.pipeline_mode<synchronous>, transform_indices = @transform_4, window_bounds = array<i64: 32, 1>}, {transform_indices = @transform_5, window_bounds = array<i64: 1, 32, 256>}]} {
    %c0 = arith.constant 0 : index
    %c0_0 = arith.constant 0 : index
    %c0_1 = arith.constant 0 : index
    %0 = vector.load %arg2[%c0, %c0_0, %c0_1] : memref<1x32x256xf32, #tpu.memory_space<vmem>>, vector<1x32x256xf32>
    %1 = vector.shape_cast %0 : vector<1x32x256xf32> to vector<32x256xf32>
    %2 = arith.truncf %1 : vector<32x256xf32> to vector<32x256xbf16>
    %c0_2 = arith.constant 0 : index
    %c0_3 = arith.constant 0 : index
    %3 = vector.load %arg3[%c0_2, %c0_3] : memref<32x32xbf16, #tpu.memory_space<vmem>>, vector<32x32xbf16>
    %cst = arith.constant dense<0.000000e+00> : vector<32x256xf32>
    %4 = tpu.matmul %3, %2, %cst {dimension_numbers = #tpu.dot_dimension_numbers<[1], [0], [0], [1], [0, 0, 1, 1], [], []>} : vector<32x32xbf16>, vector<32x256xbf16>, vector<32x256xf32> -> vector<32x256xf32>
    %c0_4 = arith.constant 0 : index
    %c0_5 = arith.constant 0 : index
    %5 = vector.load %arg4[%c0_4, %c0_5] : memref<32x1xf32, #tpu.memory_space<vmem>>, vector<32x1xf32>
    %6 = vector.broadcast %5 : vector<32x1xf32> to vector<32x256xf32>
    %7 = arith.addf %4, %6 : vector<32x256xf32>
    %cst_6 = arith.constant 0.000000e+00 : f32
    %8 = vector.broadcast %cst_6 : f32 to vector<32x256xf32>
    %9 = arith.maximumf %7, %8 : vector<32x256xf32>
    %c0_7 = arith.constant 0 : index
    %c0_8 = arith.constant 0 : index
    %10 = vector.load %arg5[%c0_7, %c0_8] : memref<32x32xbf16, #tpu.memory_space<vmem>>, vector<32x32xbf16>
    %11 = arith.truncf %9 : vector<32x256xf32> to vector<32x256xbf16>
    %cst_9 = arith.constant dense<0.000000e+00> : vector<32x256xf32>
    %12 = tpu.matmul %10, %11, %cst_9 {dimension_numbers = #tpu.dot_dimension_numbers<[1], [0], [0], [1], [0, 0, 1, 1], [], []>} : vector<32x32xbf16>, vector<32x256xbf16>, vector<32x256xf32> -> vector<32x256xf32>
    %c0_10 = arith.constant 0 : index
    %c0_11 = arith.constant 0 : index
    %13 = vector.load %arg6[%c0_10, %c0_11] : memref<32x1xf32, #tpu.memory_space<vmem>>, vector<32x1xf32>
    %14 = vector.broadcast %13 : vector<32x1xf32> to vector<32x256xf32>
    %15 = arith.addf %12, %14 : vector<32x256xf32>
    %16 = arith.addf %15, %1 : vector<32x256xf32>
    %cst_12 = arith.constant 0.000000e+00 : f32
    %17 = vector.broadcast %cst_12 : f32 to vector<32x256xf32>
    %18 = arith.maximumf %16, %17 : vector<32x256xf32>
    %c0_13 = arith.constant 0 : index
    %c0_14 = arith.constant 0 : index
    %c0_15 = arith.constant 0 : index
    %19 = vector.load %arg7[%c0_13, %c0_14, %c0_15] : memref<1x32x256xf32, #tpu.memory_space<vmem>>, vector<1x32x256xf32>
    %20 = vector.shape_cast %19 : vector<1x32x256xf32> to vector<32x256xf32>
    %21 = vector.shape_cast %18 : vector<32x256xf32> to vector<1x32x256xf32>
    tpu.vector_store %arg7[%c0_13, %c0_14, %c0_15], %21 {strides = array<i32>} : memref<1x32x256xf32, #tpu.memory_space<vmem>>, vector<1x32x256xf32>,
    return
  }
  func.func @transform_0(%arg0: i32, %arg1: i32) -> (i32, i32, i32) {
    %c0_i32 = arith.constant 0 : i32
    %c0_i32_0 = arith.constant 0 : i32
    return %arg0, %c0_i32, %arg1 : i32, i32, i32
  }
  func.func @transform_1(%arg0: i32, %arg1: i32) -> (i32, i32) {
    %c0_i32 = arith.constant 0 : i32
    %c0_i32_0 = arith.constant 0 : i32
    %c0_i32_1 = arith.constant 0 : i32
    return %c0_i32, %c0_i32_0 : i32, i32
  }
  func.func @transform_2(%arg0: i32, %arg1: i32) -> (i32, i32) {
    %c0_i32 = arith.constant 0 : i32
    %c0_i32_0 = arith.constant 0 : i32
    %c0_i32_1 = arith.constant 0 : i32
    return %c0_i32, %c0_i32_0 : i32, i32
  }
  func.func @transform_3(%arg0: i32, %arg1: i32) -> (i32, i32) {
    %c0_i32 = arith.constant 0 : i32
    %c0_i32_0 = arith.constant 0 : i32
    %c0_i32_1 = arith.constant 0 : i32
    return %c0_i32, %c0_i32_0 : i32, i32
  }
  func.func @transform_4(%arg0: i32, %arg1: i32) -> (i32, i32) {
    %c0_i32 = arith.constant 0 : i32
    %c0_i32_0 = arith.constant 0 : i32
    %c0_i32_1 = arith.constant 0 : i32
    return %c0_i32, %c0_i32_0 : i32, i32
  }
  func.func @transform_5(%arg0: i32, %arg1: i32) -> (i32, i32, i32) {
    %c0_i32 = arith.constant 0 : i32
    %c0_i32_0 = arith.constant 0 : i32
    return %arg0, %c0_i32, %arg1 : i32, i32, i32
  }
}

module attributes {stable_mosaic.version = 11 : i64} {
  func.func @_res_block_kernel(%arg0: i32, %arg1: i32, %arg2: memref<1x32x256xf32, #tpu.memory_space<vmem>>, %arg3: memref<32x32xbf16, #tpu.memory_space<vmem>>, %arg4: memref<32x1xf32, #tpu.memory_space<vmem>>, %arg5: memref<32x32xbf16, #tpu.memory_space<vmem>>, %arg6: memref<32x1xf32, #tpu.memory_space<vmem>>, %arg7: memref<1x32x256xf32, #tpu.memory_space<vmem>>) attributes {dimension_semantics = [#tpu.dimension_semantics<parallel>, #tpu.dimension_semantics<parallel>], iteration_bounds = array<i64: 2, 1>, scalar_prefetch = 0 : i64, scratch_operands = 0 : i64, tpu.core_type = #tpu.core_type<tc>, window_params = [{transform_indices = @transform_0, window_bounds = array<i64: 1, 32, 256>}, {pipeline_mode = #tpu.pipeline_mode<synchronous>, transform_indices = @transform_1, window_bounds = array<i64: 32, 32>}, {pipeline_mode = #tpu.pipeline_mode<synchronous>, transform_indices = @transform_2, window_bounds = array<i64: 32, 1>}, {pipeline_mode = #tpu.pipeline_mode<synchronous>, transform_indices = @transform_3, window_bounds = array<i64: 32, 32>}, {pipeline_mode = #tpu.pipeline_mode<synchronous>, transform_indices = @transform_4, window_bounds = array<i64: 32, 1>}, {transform_indices = @transform_5, window_bounds = array<i64: 1, 32, 256>}]} {
    %c0 = arith.constant 0 : index
    %c0_0 = arith.constant 0 : index
    %c0_1 = arith.constant 0 : index
    %0 = vector.load %arg2[%c0, %c0_0, %c0_1] : memref<1x32x256xf32, #tpu.memory_space<vmem>>, vector<1x32x256xf32>
    %1 = vector.shape_cast %0 : vector<1x32x256xf32> to vector<32x256xf32>
    %2 = arith.truncf %1 : vector<32x256xf32> to vector<32x256xbf16>
    %c0_2 = arith.constant 0 : index
    %c0_3 = arith.constant 0 : index
    %3 = vector.load %arg3[%c0_2, %c0_3] : memref<32x32xbf16, #tpu.memory_space<vmem>>, vector<32x32xbf16>
    %cst = arith.constant dense<0.000000e+00> : vector<32x256xf32>
    %4 = tpu.matmul %3, %2, %cst {dimension_numbers = #tpu.dot_dimension_numbers<[1], [0], [0], [1], [0, 0, 1, 1], [], []>} : vector<32x32xbf16>, vector<32x256xbf16>, vector<32x256xf32> -> vector<32x256xf32>
    %c0_4 = arith.constant 0 : index
    %c0_5 = arith.constant 0 : index
    %5 = vector.load %arg4[%c0_4, %c0_5] : memref<32x1xf32, #tpu.memory_space<vmem>>, vector<32x1xf32>
    %6 = vector.broadcast %5 : vector<32x1xf32> to vector<32x256xf32>
    %7 = arith.addf %4, %6 : vector<32x256xf32>
    %cst_6 = arith.constant 0.000000e+00 : f32
    %8 = vector.broadcast %cst_6 : f32 to vector<32x256xf32>
    %9 = arith.maximumf %7, %8 : vector<32x256xf32>
    %c0_7 = arith.constant 0 : index
    %c0_8 = arith.constant 0 : index
    %10 = vector.load %arg5[%c0_7, %c0_8] : memref<32x32xbf16, #tpu.memory_space<vmem>>, vector<32x32xbf16>
    %11 = arith.truncf %9 : vector<32x256xf32> to vector<32x256xbf16>
    %cst_9 = arith.constant dense<0.000000e+00> : vector<32x256xf32>
    %12 = tpu.matmul %10, %11, %cst_9 {dimension_numbers = #tpu.dot_dimension_numbers<[1], [0], [0], [1], [0, 0, 1, 1], [], []>} : vector<32x32xbf16>, vector<32x256xbf16>, vector<32x256xf32> -> vector<32x256xf32>
    %c0_10 = arith.constant 0 : index
    %c0_11 = arith.constant 0 : index
    %13 = vector.load %arg6[%c0_10, %c0_11] : memref<32x1xf32, #tpu.memory_space<vmem>>, vector<32x1xf32>
    %14 = vector.broadcast %13 : vector<32x1xf32> to vector<32x256xf32>
    %15 = arith.addf %12, %14 : vector<32x256xf32>
    %16 = arith.addf %15, %1 : vector<32x256xf32>
    %cst_12 = arith.constant 0.000000e+00 : f32
    %17 = vector.broadcast %cst_12 : f32 to vector<32x256xf32>
    %18 = arith.maximumf %16, %17 : vector<32x256xf32>
    %c0_13 = arith.constant 0 : index
    %c0_14 = arith.constant 0 : index
    %c0_15 = arith.constant 0 : index
    %19 = vector.load %arg7[%c0_13, %c0_14, %c0_15] : memref<1x32x256xf32, #tpu.memory_space<vmem>>, vector<1x32x256xf32>
    %20 = vector.shape_cast %19 : vector<1x32x256xf32> to vector<32x256xf32>
    %21 = vector.shape_cast %18 : vector<32x256xf32> to vector<1x32x256xf32>
    tpu.vector_store %arg7[%c0_13, %c0_14, %c0_15], %21 {strides = array<i32>} : memref<1x32x256xf32, #tpu.memory_space<vmem>>, vector<1x32x256xf32>,
    return
  }
  func.func @transform_0(%arg0: i32, %arg1: i32) -> (i32, i32, i32) {
    %c0_i32 = arith.constant 0 : i32
    %c0_i32_0 = arith.constant 0 : i32
    return %arg0, %c0_i32, %arg1 : i32, i32, i32
  }
  func.func @transform_1(%arg0: i32, %arg1: i32) -> (i32, i32) {
    %c0_i32 = arith.constant 0 : i32
    %c0_i32_0 = arith.constant 0 : i32
    %c0_i32_1 = arith.constant 0 : i32
    return %c0_i32, %c0_i32_0 : i32, i32
  }
  func.func @transform_2(%arg0: i32, %arg1: i32) -> (i32, i32) {
    %c0_i32 = arith.constant 0 : i32
    %c0_i32_0 = arith.constant 0 : i32
    %c0_i32_1 = arith.constant 0 : i32
    return %c0_i32, %c0_i32_0 : i32, i32
  }
  func.func @transform_3(%arg0: i32, %arg1: i32) -> (i32, i32) {
    %c0_i32 = arith.constant 0 : i32
    %c0_i32_0 = arith.constant 0 : i32
    %c0_i32_1 = arith.constant 0 : i32
    return %c0_i32, %c0_i32_0 : i32, i32
  }
  func.func @transform_4(%arg0: i32, %arg1: i32) -> (i32, i32) {
    %c0_i32 = arith.constant 0 : i32
    %c0_i32_0 = arith.constant 0 : i32
    %c0_i32_1 = arith.constant 0 : i32
    return %c0_i32, %c0_i32_0 : i32, i32
  }
  func.func @transform_5(%arg0: i32, %arg1: i32) -> (i32, i32, i32) {
    %c0_i32 = arith.constant 0 : i32
    %c0_i32_0 = arith.constant 0 : i32
    return %arg0, %c0_i32, %arg1 : i32, i32, i32
  }
}

</mosaic_0001>

<llo_original>
// kernel: tpu_custom_call.1
$region0: #{tpu_custom_call.1}
  #allocation0 [shape = 'u32[]', space=smem, size = 0x4, offset = 0x4, fixed_abs, tag = 'smem constant byte address 0x4 - core index']
  #allocation1 [shape = 'u32[144,128]{1,0:T(1,128)}', space=vmem, size = 0x12000, scoped, tag = 'internal scratch']
  %s0 = inlined_call_operand.hbm [shape: f32[2,32,256], index: 0, kind: input, shape index: {}]
  %s1 = inlined_call_operand.vmem [shape: bf16[32,32], index: 1, kind: input, shape index: {}]
  %s2 = inlined_call_operand.vmem [shape: f32[32,1], index: 2, kind: input, shape index: {}]
  %s3 = inlined_call_operand.vmem [shape: bf16[32,32], index: 3, kind: input, shape index: {}]
  %s4 = inlined_call_operand.vmem [shape: f32[32,1], index: 4, kind: input, shape index: {}]
  %s5 = inlined_call_operand.hbm [shape: f32[2,32,256], index: 5, kind: output, shape index: {}]
  %s6 = sld [smem:[#allocation0]]
  $region57: #{tpu_custom_call.1} parent=0
    _
  %s8 = ssub.s32 1, %s6
  %s9 = scalar_select 0, %s8, %s6
  $region1: #{tpu_custom_call.1} parent=0
    #allocation2 [shape = 'u8[65536]{0}', space=vmem, size = 0x10000, scoped, tag = 'input window, operand 0']
    #allocation3 [shape = 's32[2]{0}', space=sflag, size = 0x8, scoped, tag = 'scoped memory for tpu_custom_call.1']
    #allocation4 [shape = 's32[2]{0}', space=sflag, size = 0x8, scoped, tag = 'scoped memory for tpu_custom_call.1']
    #allocation5 [shape = 'u8[65536]{0}', space=vmem, size = 0x10000, scoped, tag = 'output window, operand 0']
    %10 = vsyncpa [#allocation3], 0
    %s11 = scalar_lea.sflag [#allocation3], 1
    %12 = vsyncpa %s11, 0
    %13 = vsyncpa [#allocation4], 0
    %s14 = scalar_lea.sflag [#allocation4], 1
    %15 = vsyncpa %s14, 0
    loop: start=0, step=1, limit=4
    $region2: #{tpu_custom_call.1} parent=1 // loop_pre_header
      _
    $region3: #{tpu_custom_call.1} parent=1 // loop_header
      %s17 = sphi 0, %s21
      %p18 = scmp.ge.s32.totalorder %s17, 4
      %s24 = sphi 0, %s36
      %s25 = sphi 0, %s32
      %s26 = sphi 0, %s24
      %s27 = sphi 0, %s25
      %s28 = sphi 0, %s26
      %s29 = sphi 0, %s27
      %s41 = sphi 0, %s43
      %s44 = sphi 0, %s41
      %s45 = sphi 0, %s44
      %s61 = sphi 0, %s45
      %s65 = sphi 0, %s65
      %s67 = sphi 0, %s65
      %s68 = sphi 0, %s67
      %s82 = sphi 0, %s68
      %s86 = sphi 0, %s86
      %s88 = sphi 0, %s86
      %s89 = sphi 0, %s88
      %s103 = sphi 0, %s89
      %s107 = sphi 0, %s107
      %s109 = sphi 0, %s107
      %s110 = sphi 0, %s109
      %s124 = sphi 0, %s110
      %s128 = sphi 0, %s128
      %s130 = sphi 0, %s128
      %s131 = sphi 0, %s130
      %s145 = sphi 0, %s131
      %s153 = sphi 0, %s155
      %s156 = sphi 0, %s153
      %s157 = sphi 0, %s156
      %s173 = sphi 0, %s157
    $region4: #{tpu_custom_call.1} parent=1 // loop_header_branch
      %20 = sbr.rel (%p18) target = $region8
    $region5: #{tpu_custom_call.1} parent=1 // loop_body
      %s22 = ssub.s32 %s17, 1
      %s23 = ssub.s32 %s17, 2
      %s30 = sadd.s32 1, %s25
      %p31 = scmp.ge.s32.totalorder %s30, 1
      %s32 = scalar_select %p31, 0, %s30
      %s33 = sadd.s32 1, %s24
      %s34 = scalar_select %p31, %s33, %s24
      %p35 = scmp.ge.s32.totalorder %s34, 2
      %s36 = scalar_select %p35, 0, %s34
      %s37 = ssub.s32 %s24, %s36
      %s38 = ssub.s32 %s25, %s32
      %s39 = sor.u32 %s37, %s38
      %p40 = scmp.eq.s32.totalorder %s39, 0
      %s42 = sadd.s32 %s41, 1
      %s43 = scalar_select %p40, %s41, %s42
      %p46 = pneg %p40
      %p47 = scmp.eq.s32.totalorder %s17, 1
      %p48 = por %p46, %p47
      %p49 = scmp.ne.s32.totalorder %s41, %s44
      %p50 = scmp.eq.s32.totalorder %s17, 0
      %p51 = por %p49, %p50
      %p52 = scmp.ne.s32.totalorder %s41, %s44
      %p53 = scmp.eq.s32.totalorder %s22, 1
      %p54 = por %p52, %p53
      %p55 = scmp.ne.s32.totalorder %s44, %s45
      %p56 = scmp.eq.s32.totalorder %s22, 0
      %p57 = por %p55, %p56
      %p58 = scmp.ne.s32.totalorder %s44, %s45
      %p59 = scmp.eq.s32.totalorder %s23, 1
      %p60 = por %p58, %p59
      %p62 = scmp.ne.s32.totalorder %s45, %s61
      %p63 = scmp.eq.s32.totalorder %s23, 0
      %p64 = por %p62, %p63
      %s66 = sadd.s32 %s65, 1
      %p69 = scmp.eq.s32.totalorder %s17, 1
      %p70 = scmp.ne.s32.totalorder %s65, %s67
      %p71 = scmp.eq.s32.totalorder %s17, 0
      %p72 = por %p70, %p71
      %p73 = scmp.ne.s32.totalorder %s65, %s67
      %p74 = scmp.eq.s32.totalorder %s22, 1
      %p75 = por %p73, %p74
      %p76 = scmp.ne.s32.totalorder %s67, %s68
      %p77 = scmp.eq.s32.totalorder %s22, 0
      %p78 = por %p76, %p77
      %p79 = scmp.ne.s32.totalorder %s67, %s68
      %p80 = scmp.eq.s32.totalorder %s23, 1
      %p81 = por %p79, %p80
      %p83 = scmp.ne.s32.totalorder %s68, %s82
      %p84 = scmp.eq.s32.totalorder %s23, 0
      %p85 = por %p83, %p84
      %s87 = sadd.s32 %s86, 1
      %p90 = scmp.eq.s32.totalorder %s17, 1
      %p91 = scmp.ne.s32.totalorder %s86, %s88
      %p92 = scmp.eq.s32.totalorder %s17, 0
      %p93 = por %p91, %p92
      %p94 = scmp.ne.s32.totalorder %s86, %s88
      %p95 = scmp.eq.s32.totalorder %s22, 1
      %p96 = por %p94, %p95
      %p97 = scmp.ne.s32.totalorder %s88, %s89
      %p98 = scmp.eq.s32.totalorder %s22, 0
      %p99 = por %p97, %p98
      %p100 = scmp.ne.s32.totalorder %s88, %s89
      %p101 = scmp.eq.s32.totalorder %s23, 1
      %p102 = por %p100, %p101
      %p104 = scmp.ne.s32.totalorder %s89, %s103
      %p105 = scmp.eq.s32.totalorder %s23, 0
      %p106 = por %p104, %p105
      %s108 = sadd.s32 %s107, 1
      %p111 = scmp.eq.s32.totalorder %s17, 1
      %p112 = scmp.ne.s32.totalorder %s107, %s109
      %p113 = scmp.eq.s32.totalorder %s17, 0
      %p114 = por %p112, %p113
      %p115 = scmp.ne.s32.totalorder %s107, %s109
      %p116 = scmp.eq.s32.totalorder %s22, 1
      %p117 = por %p115, %p116
      %p118 = scmp.ne.s32.totalorder %s109, %s110
      %p119 = scmp.eq.s32.totalorder %s22, 0
      %p120 = por %p118, %p119
      %p121 = scmp.ne.s32.totalorder %s109, %s110
      %p122 = scmp.eq.s32.totalorder %s23, 1
      %p123 = por %p121, %p122
      %p125 = scmp.ne.s32.totalorder %s110, %s124
      %p126 = scmp.eq.s32.totalorder %s23, 0
      %p127 = por %p125, %p126
      %s129 = sadd.s32 %s128, 1
      %p132 = scmp.eq.s32.totalorder %s17, 1
      %p133 = scmp.ne.s32.totalorder %s128, %s130
      %p134 = scmp.eq.s32.totalorder %s17, 0
      %p135 = por %p133, %p134
      %p136 = scmp.ne.s32.totalorder %s128, %s130
      %p137 = scmp.eq.s32.totalorder %s22, 1
      %p138 = por %p136, %p137
      %p139 = scmp.ne.s32.totalorder %s130, %s131
      %p140 = scmp.eq.s32.totalorder %s22, 0
      %p141 = por %p139, %p140
      %p142 = scmp.ne.s32.totalorder %s130, %s131
      %p143 = scmp.eq.s32.totalorder %s23, 1
      %p144 = por %p142, %p143
      %p146 = scmp.ne.s32.totalorder %s131, %s145
      %p147 = scmp.eq.s32.totalorder %s23, 0
      %p148 = por %p146, %p147
      %s149 = ssub.s32 %s24, %s36
      %s150 = ssub.s32 %s25, %s32
      %s151 = sor.u32 %s149, %s150
      %p152 = scmp.eq.s32.totalorder %s151, 0
      %s154 = sadd.s32 %s153, 1
      %s155 = scalar_select %p152, %s153, %s154
      %p158 = pneg %p152
      %p159 = scmp.eq.s32.totalorder %s17, 1
      %p160 = por %p158, %p159
      %p161 = scmp.ne.s32.totalorder %s153, %s156
      %p162 = scmp.eq.s32.totalorder %s17, 0
      %p163 = por %p161, %p162
      %p164 = scmp.ne.s32.totalorder %s153, %s156
      %p165 = scmp.eq.s32.totalorder %s22, 1
      %p166 = por %p164, %p165
      %p167 = scmp.ne.s32.totalorder %s156, %s157
      %p168 = scmp.eq.s32.totalorder %s22, 0
      %p169 = por %p167, %p168
      %p170 = scmp.ne.s32.totalorder %s156, %s157
      %p171 = scmp.eq.s32.totalorder %s23, 1
      %p172 = por %p170, %p171
      %p174 = scmp.ne.s32.totalorder %s157, %s173
      %p175 = scmp.eq.s32.totalorder %s23, 0
      %p176 = por %p174, %p175
      %p177 = scmp.le.s32.totalorder 1, %s17
      %p178 = scmp.lt.s32.totalorder %s17, 3
      %p179 = pnand %p177, %p178
      %p180 = pneg %p179
      // Predicated region
      $region9: #{tpu_custom_call.1} parent=5 // pred_check
        _
      $region10: #{tpu_custom_call.1} parent=5 // pred_check_branch
        %182 = sbr.rel (%p179) target = $region12
      $region11: #{tpu_custom_call.1} parent=5 // pred_region
        %s183 = ssub.s32 %s17, 1
        // Predicated region
        $region13: #{tpu_custom_call.1} parent=11 // pred_check
          %p184 = pneg %p78
        $region14: #{tpu_custom_call.1} parent=11 // pred_check_branch
          %186 = sbr.rel (%p184) target = $region16
        $region15: #{tpu_custom_call.1} parent=11 // pred_region
          _
        $region16: #{tpu_custom_call.1} parent=11 // pred_fallthru
          _
        // Predicated region
        $region17: #{tpu_custom_call.1} parent=11 // pred_check
          %p187 = pneg %p99
        $region18: #{tpu_custom_call.1} parent=11 // pred_check_branch
          %189 = sbr.rel (%p187) target = $region20
        $region19: #{tpu_custom_call.1} parent=11 // pred_region
          _
        $region20: #{tpu_custom_call.1} parent=11 // pred_fallthru
          _
        // Predicated region
        $region21: #{tpu_custom_call.1} parent=11 // pred_check
          %p190 = pneg %p120
        $region22: #{tpu_custom_call.1} parent=11 // pred_check_branch
          %192 = sbr.rel (%p190) target = $region24
        $region23: #{tpu_custom_call.1} parent=11 // pred_region
          _
        $region24: #{tpu_custom_call.1} parent=11 // pred_fallthru
          _
        // Predicated region
        $region25: #{tpu_custom_call.1} parent=11 // pred_check
          %p193 = pneg %p141
        $region26: #{tpu_custom_call.1} parent=11 // pred_check_branch
          %195 = sbr.rel (%p193) target = $region28
        $region27: #{tpu_custom_call.1} parent=11 // pred_region
          _
        $region28: #{tpu_custom_call.1} parent=11 // pred_fallthru
          _
      $region12: #{tpu_custom_call.1} parent=5 // pred_fallthru
        _
      %p196 = scmp.lt.s32.totalorder %s17, 2
      // Predicated region
      $region29: #{tpu_custom_call.1} parent=5 // pred_check
        %p197 = pneg %p196
      $region30: #{tpu_custom_call.1} parent=5 // pred_check_branch
        %199 = sbr.rel (%p197) target = $region32
      $region31: #{tpu_custom_call.1} parent=5 // pred_region
        // Predicated region
        $region33: #{tpu_custom_call.1} parent=31 // pred_check
          %p200 = pneg %p51
        $region34: #{tpu_custom_call.1} parent=31 // pred_check_branch
          %202 = sbr.rel (%p200) target = $region36
        $region35: #{tpu_custom_call.1} parent=31 // pred_region
          %s203 = sand.u32 %s41, 1
          %s204 = scalar_lea.sflag [#allocation3], %s203
          %s205 = sand.u32 %s41, 1
          %s206 = smul.addr %s205, 64
          %s207 = scalar_lea.vmem [#allocation2], %s206
          %s208 = smul.u32 2, %s25
          %s210 = ssub.s32 1024, 1024
          %211 = vsyncadd %s204, %s210
          %s212 = smul.addr %s24, 8
          %s213 = sadd.s32 %s208, %s212
          %s214 = smul.addr %s213, 128
          %s215 = scalar_lea.hbm %s0, %s214
          %s216 = sshll.u32 %s207, 4
          %s217 = int_to_ptr.vmem [resolvable:$true] %s216
          %222 = dma.hbm_to_vmem [thread:$0]  %s215, 1024, %s217, %s204, 256, 256, 16
        $region36: #{tpu_custom_call.1} parent=31 // pred_fallthru
          _
      $region32: #{tpu_custom_call.1} parent=5 // pred_fallthru
        _
      %p223 = scmp.le.s32.totalorder 1, %s17
      %p224 = scmp.lt.s32.totalorder %s17, 3
      %p225 = pnand %p223, %p224
      %p226 = pneg %p225
      // Predicated region
      $region37: #{tpu_custom_call.1} parent=5 // pred_check
        _
      $region38: #{tpu_custom_call.1} parent=5 // pred_check_branch
        %228 = sbr.rel (%p225) target = $region40
      $region39: #{tpu_custom_call.1} parent=5 // pred_region
        %s229 = ssub.s32 %s17, 1
        %s230 = sand.u32 %s44, 1
        %s231 = scalar_lea.sflag [#allocation3], %s230
        %s232 = sand.u32 %s44, 1
        %s233 = smul.addr %s232, 64
        %s234 = scalar_lea.vmem [#allocation2], %s233
        // Predicated region
        $region41: #{tpu_custom_call.1} parent=39 // pred_check
          %p235 = pneg %p57
        $region42: #{tpu_custom_call.1} parent=39 // pred_check_branch
          %237 = sbr.rel (%p235) target = $region44
        $region43: #{tpu_custom_call.1} parent=39 // pred_region
          %238 = dma.done %s231, 1024
        $region44: #{tpu_custom_call.1} parent=39 // pred_fallthru
          _
        %s239 = sand.u32 %s44, 1
        %s240 = scalar_lea.sflag [#allocation3], %s239
        %s241 = sand.u32 %s44, 1
        %s242 = smul.addr %s241, 64
        %s243 = scalar_lea.vmem [#allocation2], %s242
        %p244 = pneg %p57
        %p245 = pneg %p54
        %p246 = pneg %p78
        %p247 = pneg %p75
        %p248 = pneg %p99
        %p249 = pneg %p96
        %p250 = pneg %p120
        %p251 = pneg %p117
        %p252 = pneg %p141
        %p253 = pneg %p138
        %p254 = pneg %p169
        %p255 = pneg %p166
        %s256 = sand.u32 %s156, 1
        %s257 = scalar_lea.sflag [#allocation4], %s256
        %s258 = sand.u32 %s156, 1
        %s259 = smul.addr %s258, 64
        %s260 = scalar_lea.vmem [#allocation5], %s259
        %s261 = smul.u32 2, %s27
        %s262 = smul.u32 2, %s27
        %v264 = vld [vmem:[%s234] sm:$0xff]
        %v265 = vld [vmem:[%s234 + $0x8] sm:$0xff]
        %v266 = vld [vmem:[%s234 + $0x10] sm:$0xff]
        %v267 = vld [vmem:[%s234 + $0x18] sm:$0xff]
        %v268 = vld [vmem:[%s234 + $0x20] sm:$0xff]
        %v269 = vld [vmem:[%s234 + $0x28] sm:$0xff]
        %v270 = vld [vmem:[%s234 + $0x30] sm:$0xff]
        %v271 = vld [vmem:[%s234 + $0x38] sm:$0xff]
        %v272 = vpack.c.bf16 %v266, %v264
        %v273 = vpack.c.bf16 %v267, %v265
        %v274 = vpack.c.bf16 %v270, %v268
        %v275 = vpack.c.bf16 %v271, %v269
        %v276 = vld [vmem:[%s1] sm:$0xf]
        %v277 = vld [vmem:[%s1 + $0x4] sm:$0xf]
        %v278 = vld [vmem:[%s1 + $0x8] sm:$0xf]
        %v279 = vld [vmem:[%s1 + $0xc] sm:$0xf]
        %v280 = vld [vmem:[%s2] sm:$0xff]
        %v281 = vld [vmem:[%s2 + $0x8] sm:$0xff]
        %v282 = vld [vmem:[%s2 + $0x10] sm:$0xff]
        %v283 = vld [vmem:[%s2 + $0x18] sm:$0xff]
        %285 = vset.pattern.permute.xlu0 0
        %286 = vperm.xlu0 %285, %v280
        %v287 = vpop.permute.xlu0 %286
        %290 = vset.pattern.permute.xlu0 0
        %291 = vperm.xlu0 %290, %v281
        %v292 = vpop.permute.xlu0 %291
        %295 = vset.pattern.permute.xlu0 0
        %296 = vperm.xlu0 %295, %v282
        %v297 = vpop.permute.xlu0 %296
        %300 = vset.pattern.permute.xlu0 0
        %301 = vperm.xlu0 %300, %v283
        %v302 = vpop.permute.xlu0 %301
        %v308 = vunpack.c.l.b16 %v276
        %v309 = vunpack.c.l.b16 %v277
        %v310 = vunpack.c.l.b16 %v278
        %v311 = vunpack.c.l.b16 %v279
        %v312 = vpack.c.b16 %v309, %v308
        %v313 = vpack.c.b16 %v311, %v310
        %vm314 = vcmask 261120
        %v316 = vsel %vm314, %v312, 0
        %v319 = vsel %vm314, %v313, 0
        %321 = vmatprep.subr.bf16.mxu0 0
        %322 = vmatpush1.bf16.msra.mxu0 0
        %323 = vmatprep.subr.bf16.mxu0 0
        %324 = vmatpush1.bf16.msra.mxu0 0
        %325 = vmatprep.subr.bf16.mxu0 0
        %326 = vmatpush1.bf16.msra.mxu0 0
        %327 = vmatprep.subr.bf16.mxu0 0
        %328 = vmatpush1.bf16.msra.mxu0 0
        %329 = vmatprep.subr.bf16.mxu0 0
        %330 = vmatpush1.bf16.msra.mxu0 0
        %331 = vmatprep.subr.bf16.mxu0 0
        %332 = vmatpush1.bf16.msra.mxu0 0
        %333 = vmatprep.subr.bf16.mxu0 %v275
        %334 = vmatpush1.bf16.msra.mxu0 %v274
        %335 = vmatprep.subr.bf16.mxu0 %v273
        %336 = vmatpush1.bf16.msra.mxu0 %v272
        %337 = vmatprep.subr.bf16.mxu0 0
        %338 = vmatpush2.bf16.msra.mxu0 0
        %339 = vmatprep.subr.bf16.mxu0 0
        %340 = vmatpush2.bf16.msra.mxu0 0
        %341 = vmatprep.subr.bf16.mxu0 0
        %342 = vmatpush2.bf16.msra.mxu0 0
        %343 = vmatprep.subr.bf16.mxu0 0
        %344 = vmatpush2.bf16.msra.mxu0 0
        %345 = vmatprep.subr.bf16.mxu0 0
        %346 = vmatpush2.bf16.msra.mxu0 0
        %347 = vmatprep.subr.bf16.mxu0 0
        %348 = vmatpush2.bf16.msra.mxu0 0
        %349 = vmatprep.subr.bf16.mxu0 0
        %350 = vmatpush2.bf16.msra.mxu0 0
        %351 = vmatprep.subr.bf16.mxu0 0
        %352 = vmatpush2.bf16.msra.mxu0 0
        %353 = vmatprep.mubr.bf16.mxu0 0
        %354 = vmatmul.mubr.bf16.gmra.mxu0 %v316
        %v355 = vpop.f32.mrf.mxu0
        %v356 = vadd.f32 %v287, %v355
        %v357 = vpop.f32.mrf.mxu0
        %v358 = vadd.f32 %v287, %v357
        %v359 = vpop.f32.mrf.mxu0
        %v360 = vadd.f32 %v292, %v359
        %v361 = vpop.f32.mrf.mxu0
        %v362 = vadd.f32 %v292, %v361
        %363 = vmatprep.mubr.bf16.mxu0 0
        %364 = vmatmul.mubr.bf16.gmra.mxu0 %v319
        %v365 = vpop.f32.mrf.mxu0
        %v366 = vadd.f32 %v297, %v365
        %v367 = vpop.f32.mrf.mxu0
        %v368 = vadd.f32 %v297, %v367
        %v369 = vpop.f32.mrf.mxu0
        %v370 = vadd.f32 %v302, %v369
        %v371 = vpop.f32.mrf.mxu0
        %v372 = vadd.f32 %v302, %v371
        %373 = vdwg.mxu0
        %v374 = vmax.f32 %v356, 0.0
        %v375 = vmax.f32 %v358, 0.0
        %v376 = vmax.f32 %v360, 0.0
        %v377 = vmax.f32 %v362, 0.0
        %v378 = vmax.f32 %v366, 0.0
        %v379 = vmax.f32 %v368, 0.0
        %v380 = vmax.f32 %v370, 0.0
        %v381 = vmax.f32 %v372, 0.0
        %v382 = vld [vmem:[%s3] sm:$0xf]
        %v383 = vld [vmem:[%s3 + $0x4] sm:$0xf]
        %v384 = vld [vmem:[%s3 + $0x8] sm:$0xf]
        %v385 = vld [vmem:[%s3 + $0xc] sm:$0xf]
        %v386 = vpack.c.bf16 %v376, %v374
        %v387 = vpack.c.bf16 %v377, %v375
        %v388 = vpack.c.bf16 %v380, %v378
        %v389 = vpack.c.bf16 %v381, %v379
        %v390 = vld [vmem:[%s4] sm:$0xff]
        %v391 = vld [vmem:[%s4 + $0x8] sm:$0xff]
        %v392 = vld [vmem:[%s4 + $0x10] sm:$0xff]
        %v393 = vld [vmem:[%s4 + $0x18] sm:$0xff]
        %395 = vset.pattern.permute.xlu0 0
        %396 = vperm.xlu0 %395, %v390
        %v397 = vpop.permute.xlu0 %396
        %400 = vset.pattern.permute.xlu0 0
        %401 = vperm.xlu0 %400, %v391
        %v402 = vpop.permute.xlu0 %401
        %405 = vset.pattern.permute.xlu0 0
        %406 = vperm.xlu0 %405, %v392
        %v407 = vpop.permute.xlu0 %406
        %410 = vset.pattern.permute.xlu0 0
        %411 = vperm.xlu0 %410, %v393
        %v412 = vpop.permute.xlu0 %411
        %v418 = vunpack.c.l.b16 %v382
        %v419 = vunpack.c.l.b16 %v383
        %v420 = vunpack.c.l.b16 %v384
        %v421 = vunpack.c.l.b16 %v385
        %v422 = vpack.c.b16 %v419, %v418
        %v423 = vpack.c.b16 %v421, %v420
        %v425 = vsel %vm314, %v422, 0
        %v428 = vsel %vm314, %v423, 0
        %430 = vmatprep.subr.bf16.mxu0 0
        %431 = vmatpush1.bf16.msra.mxu0 0
        %432 = vmatprep.subr.bf16.mxu0 0
        %433 = vmatpush1.bf16.msra.mxu0 0
        %434 = vmatprep.subr.bf16.mxu0 0
        %435 = vmatpush1.bf16.msra.mxu0 0
        %436 = vmatprep.subr.bf16.mxu0 0
        %437 = vmatpush1.bf16.msra.mxu0 0
        %438 = vmatprep.subr.bf16.mxu0 0
        %439 = vmatpush1.bf16.msra.mxu0 0
        %440 = vmatprep.subr.bf16.mxu0 0
        %441 = vmatpush1.bf16.msra.mxu0 0
        %442 = vmatprep.subr.bf16.mxu0 %v389
        %443 = vmatpush1.bf16.msra.mxu0 %v388
        %444 = vmatprep.subr.bf16.mxu0 %v387
        %445 = vmatpush1.bf16.msra.mxu0 %v386
        %446 = vmatprep.subr.bf16.mxu0 0
        %447 = vmatpush2.bf16.msra.mxu0 0
        %448 = vmatprep.subr.bf16.mxu0 0
        %449 = vmatpush2.bf16.msra.mxu0 0
        %450 = vmatprep.subr.bf16.mxu0 0
        %451 = vmatpush2.bf16.msra.mxu0 0
        %452 = vmatprep.subr.bf16.mxu0 0
        %453 = vmatpush2.bf16.msra.mxu0 0
        %454 = vmatprep.subr.bf16.mxu0 0
        %455 = vmatpush2.bf16.msra.mxu0 0
        %456 = vmatprep.subr.bf16.mxu0 0
        %457 = vmatpush2.bf16.msra.mxu0 0
        %458 = vmatprep.subr.bf16.mxu0 0
        %459 = vmatpush2.bf16.msra.mxu0 0
        %460 = vmatprep.subr.bf16.mxu0 0
        %461 = vmatpush2.bf16.msra.mxu0 0
        %462 = vmatprep.mubr.bf16.mxu0 0
        %463 = vmatmul.mubr.bf16.gmra.mxu0 %v425
        %v464 = vpop.f32.mrf.mxu0
        %v465 = vadd.f32 %v397, %v464
        %v466 = vpop.f32.mrf.mxu0
        %v467 = vadd.f32 %v397, %v466
        %v468 = vpop.f32.mrf.mxu0
        %v469 = vadd.f32 %v402, %v468
        %v470 = vpop.f32.mrf.mxu0
        %v471 = vadd.f32 %v402, %v470
        %472 = vmatprep.mubr.bf16.mxu0 0
        %473 = vmatmul.mubr.bf16.gmra.mxu0 %v428
        %v474 = vpop.f32.mrf.mxu0
        %v475 = vadd.f32 %v407, %v474
        %v476 = vpop.f32.mrf.mxu0
        %v477 = vadd.f32 %v407, %v476
        %v478 = vpop.f32.mrf.mxu0
        %v479 = vadd.f32 %v412, %v478
        %v480 = vpop.f32.mrf.mxu0
        %v481 = vadd.f32 %v412, %v480
        %482 = vdwg.mxu0
        %v483 = vadd.f32 %v465, %v264
        %v484 = vadd.f32 %v467, %v265
        %v485 = vadd.f32 %v469, %v266
        %v486 = vadd.f32 %v471, %v267
        %v487 = vadd.f32 %v475, %v268
        %v488 = vadd.f32 %v477, %v269
        %v489 = vadd.f32 %v479, %v270
        %v490 = vadd.f32 %v481, %v271
        %v491 = vmax.f32 %v483, 0.0
        %v492 = vmax.f32 %v484, 0.0
        %v493 = vmax.f32 %v485, 0.0
        %v494 = vmax.f32 %v486, 0.0
        %v495 = vmax.f32 %v487, 0.0
        %v496 = vmax.f32 %v488, 0.0
        %v497 = vmax.f32 %v489, 0.0
        %v498 = vmax.f32 %v490, 0.0
        %499 = vst [vmem:[%s260] sm:$0xff] %v491
        %500 = vst [vmem:[%s260 + $0x8] sm:$0xff] %v492
        %501 = vst [vmem:[%s260 + $0x10] sm:$0xff] %v493
        %502 = vst [vmem:[%s260 + $0x18] sm:$0xff] %v494
        %503 = vst [vmem:[%s260 + $0x20] sm:$0xff] %v495
        %504 = vst [vmem:[%s260 + $0x28] sm:$0xff] %v496
        %505 = vst [vmem:[%s260 + $0x30] sm:$0xff] %v497
        %506 = vst [vmem:[%s260 + $0x38] sm:$0xff] %v498
        %s507 = sand.u32 %s156, 1
        %s508 = scalar_lea.sflag [#allocation4], %s507
        %s509 = sand.u32 %s156, 1
        %s510 = smul.addr %s509, 64
        %s511 = scalar_lea.vmem [#allocation5], %s510
        // Predicated region
        $region45: #{tpu_custom_call.1} parent=39 // pred_check
          %p512 = pneg %p166
        $region46: #{tpu_custom_call.1} parent=39 // pred_check_branch
          %514 = sbr.rel (%p512) target = $region48
        $region47: #{tpu_custom_call.1} parent=39 // pred_region
          %s515 = smul.u32 2, %s27
          %s517 = ssub.s32 1024, 1024
          %518 = vsyncadd %s508, %s517
          %s519 = smul.addr %s26, 8
          %s520 = sadd.s32 %s515, %s519
          %s521 = smul.addr %s520, 128
          %s522 = scalar_lea.hbm %s5, %s521
          %s523 = sshll.u32 %s511, 4
          %s524 = int_to_ptr.vmem [resolvable:$true] %s523
          %529 = dma.vmem_to_hbm [thread:$0]  %s524, 1024, %s522, %s508, 256, 256, 16
        $region48: #{tpu_custom_call.1} parent=39 // pred_fallthru
          _
      $region40: #{tpu_custom_call.1} parent=5 // pred_fallthru
        _
      %p530 = scmp.le.s32.totalorder 2, %s17
      // Predicated region
      $region49: #{tpu_custom_call.1} parent=5 // pred_check
        %p531 = pneg %p530
      $region50: #{tpu_custom_call.1} parent=5 // pred_check_branch
        %533 = sbr.rel (%p531) target = $region52
      $region51: #{tpu_custom_call.1} parent=5 // pred_region
        %s534 = ssub.s32 %s17, 2
        // Predicated region
        $region53: #{tpu_custom_call.1} parent=51 // pred_check
          %p535 = pneg %p172
        $region54: #{tpu_custom_call.1} parent=51 // pred_check_branch
          %537 = sbr.rel (%p535) target = $region56
        $region55: #{tpu_custom_call.1} parent=51 // pred_region
          %s538 = sand.u32 %s157, 1
          %s539 = scalar_lea.sflag [#allocation4], %s538
          %s540 = sand.u32 %s157, 1
          %s541 = smul.addr %s540, 64
          %s542 = scalar_lea.vmem [#allocation5], %s541
          %543 = dma.done %s539, 1024
        $region56: #{tpu_custom_call.1} parent=51 // pred_fallthru
          _
      $region52: #{tpu_custom_call.1} parent=5 // pred_fallthru
        _
    $region6: #{tpu_custom_call.1} parent=1 // loop_footer
      %s21 = sadd.s32 1, %s17
    $region7: #{tpu_custom_call.1} parent=1 // loop_footer_branch
      %16 = sbr.rel target = $region3
    $region8: #{tpu_custom_call.1} parent=1 // loop_exit
      _
    %544 = vsyncpa [#allocation3], 1
    %s545 = scalar_lea.sflag [#allocation3], 1
    %546 = vsyncpa %s545, 1
    %547 = vsyncpa [#allocation4], 1
    %s548 = scalar_lea.sflag [#allocation4], 1
    %549 = vsyncpa %s548, 1

// kernel: tpu_custom_call.1
$region0: #{tpu_custom_call.1}
  #allocation0 [shape = 'u32[]', space=smem, size = 0x4, offset = 0x4, fixed_abs, tag = 'smem constant byte address 0x4 - core index']
  #allocation1 [shape = 'u32[144,128]{1,0:T(1,128)}', space=vmem, size = 0x12000, scoped, tag = 'internal scratch']
  %s0 = inlined_call_operand.hbm [shape: f32[2,32,256], index: 0, kind: input, shape index: {}]
  %s1 = inlined_call_operand.vmem [shape: bf16[32,32], index: 1, kind: input, shape index: {}]
  %s2 = inlined_call_operand.vmem [shape: f32[32,1], index: 2, kind: input, shape index: {}]
  %s3 = inlined_call_operand.vmem [shape: bf16[32,32], index: 3, kind: input, shape index: {}]
  %s4 = inlined_call_operand.vmem [shape: f32[32,1], index: 4, kind: input, shape index: {}]
  %s5 = inlined_call_operand.hbm [shape: f32[2,32,256], index: 5, kind: output, shape index: {}]
  %s6 = sld [smem:[#allocation0]]
  $region57: #{tpu_custom_call.1} parent=0
    _
  %s8 = ssub.s32 1, %s6
  %s9 = scalar_select 0, %s8, %s6
  $region1: #{tpu_custom_call.1} parent=0
    #allocation2 [shape = 'u8[65536]{0}', space=vmem, size = 0x10000, scoped, tag = 'input window, operand 0']
    #allocation3 [shape = 's32[2]{0}', space=sflag, size = 0x8, scoped, tag = 'scoped memory for tpu_custom_call.1']
    #allocation4 [shape = 's32[2]{0}', space=sflag, size = 0x8, scoped, tag = 'scoped memory for tpu_custom_call.1']
    #allocation5 [shape = 'u8[65536]{0}', space=vmem, size = 0x10000, scoped, tag = 'output window, operand 0']
    %10 = vsyncpa [#allocation3], 0
    %s11 = scalar_lea.sflag [#allocation3], 1
    %12 = vsyncpa %s11, 0
    %13 = vsyncpa [#allocation4], 0
    %s14 = scalar_lea.sflag [#allocation4], 1
    %15 = vsyncpa %s14, 0
    loop: start=0, step=1, limit=4
    $region2: #{tpu_custom_call.1} parent=1 // loop_pre_header
      _
    $region3: #{tpu_custom_call.1} parent=1 // loop_header
      %s17 = sphi 0, %s21
      %p18 = scmp.ge.s32.totalorder %s17, 4
      %s24 = sphi 0, %s36
      %s25 = sphi 0, %s32
      %s26 = sphi 0, %s24
      %s27 = sphi 0, %s25
      %s28 = sphi 0, %s26
      %s29 = sphi 0, %s27
      %s41 = sphi 0, %s43
      %s44 = sphi 0, %s41
      %s45 = sphi 0, %s44
      %s61 = sphi 0, %s45
      %s65 = sphi 0, %s65
      %s67 = sphi 0, %s65
      %s68 = sphi 0, %s67
      %s82 = sphi 0, %s68
      %s86 = sphi 0, %s86
      %s88 = sphi 0, %s86
      %s89 = sphi 0, %s88
      %s103 = sphi 0, %s89
      %s107 = sphi 0, %s107
      %s109 = sphi 0, %s107
      %s110 = sphi 0, %s109
      %s124 = sphi 0, %s110
      %s128 = sphi 0, %s128
      %s130 = sphi 0, %s128
      %s131 = sphi 0, %s130
      %s145 = sphi 0, %s131
      %s153 = sphi 0, %s155
      %s156 = sphi 0, %s153
      %s157 = sphi 0, %s156
      %s173 = sphi 0, %s157
    $region4: #{tpu_custom_call.1} parent=1 // loop_header_branch
      %20 = sbr.rel (%p18) target = $region8
    $region5: #{tpu_custom_call.1} parent=1 // loop_body
      %s22 = ssub.s32 %s17, 1
      %s23 = ssub.s32 %s17, 2
      %s30 = sadd.s32 1, %s25
      %p31 = scmp.ge.s32.totalorder %s30, 1
      %s32 = scalar_select %p31, 0, %s30
      %s33 = sadd.s32 1, %s24
      %s34 = scalar_select %p31, %s33, %s24
      %p35 = scmp.ge.s32.totalorder %s34, 2
      %s36 = scalar_select %p35, 0, %s34
      %s37 = ssub.s32 %s24, %s36
      %s38 = ssub.s32 %s25, %s32
      %s39 = sor.u32 %s37, %s38
      %p40 = scmp.eq.s32.totalorder %s39, 0
      %s42 = sadd.s32 %s41, 1
      %s43 = scalar_select %p40, %s41, %s42
      %p46 = pneg %p40
      %p47 = scmp.eq.s32.totalorder %s17, 1
      %p48 = por %p46, %p47
      %p49 = scmp.ne.s32.totalorder %s41, %s44
      %p50 = scmp.eq.s32.totalorder %s17, 0
      %p51 = por %p49, %p50
      %p52 = scmp.ne.s32.totalorder %s41, %s44
      %p53 = scmp.eq.s32.totalorder %s22, 1
      %p54 = por %p52, %p53
      %p55 = scmp.ne.s32.totalorder %s44, %s45
      %p56 = scmp.eq.s32.totalorder %s22, 0
      %p57 = por %p55, %p56
      %p58 = scmp.ne.s32.totalorder %s44, %s45
      %p59 = scmp.eq.s32.totalorder %s23, 1
      %p60 = por %p58, %p59
      %p62 = scmp.ne.s32.totalorder %s45, %s61
      %p63 = scmp.eq.s32.totalorder %s23, 0
      %p64 = por %p62, %p63
      %s66 = sadd.s32 %s65, 1
      %p69 = scmp.eq.s32.totalorder %s17, 1
      %p70 = scmp.ne.s32.totalorder %s65, %s67
      %p71 = scmp.eq.s32.totalorder %s17, 0
      %p72 = por %p70, %p71
      %p73 = scmp.ne.s32.totalorder %s65, %s67
      %p74 = scmp.eq.s32.totalorder %s22, 1
      %p75 = por %p73, %p74
      %p76 = scmp.ne.s32.totalorder %s67, %s68
      %p77 = scmp.eq.s32.totalorder %s22, 0
      %p78 = por %p76, %p77
      %p79 = scmp.ne.s32.totalorder %s67, %s68
      %p80 = scmp.eq.s32.totalorder %s23, 1
      %p81 = por %p79, %p80
      %p83 = scmp.ne.s32.totalorder %s68, %s82
      %p84 = scmp.eq.s32.totalorder %s23, 0
      %p85 = por %p83, %p84
      %s87 = sadd.s32 %s86, 1
      %p90 = scmp.eq.s32.totalorder %s17, 1
      %p91 = scmp.ne.s32.totalorder %s86, %s88
      %p92 = scmp.eq.s32.totalorder %s17, 0
      %p93 = por %p91, %p92
      %p94 = scmp.ne.s32.totalorder %s86, %s88
      %p95 = scmp.eq.s32.totalorder %s22, 1
      %p96 = por %p94, %p95
      %p97 = scmp.ne.s32.totalorder %s88, %s89
      %p98 = scmp.eq.s32.totalorder %s22, 0
      %p99 = por %p97, %p98
      %p100 = scmp.ne.s32.totalorder %s88, %s89
      %p101 = scmp.eq.s32.totalorder %s23, 1
      %p102 = por %p100, %p101
      %p104 = scmp.ne.s32.totalorder %s89, %s103
      %p105 = scmp.eq.s32.totalorder %s23, 0
      %p106 = por %p104, %p105
      %s108 = sadd.s32 %s107, 1
      %p111 = scmp.eq.s32.totalorder %s17, 1
      %p112 = scmp.ne.s32.totalorder %s107, %s109
      %p113 = scmp.eq.s32.totalorder %s17, 0
      %p114 = por %p112, %p113
      %p115 = scmp.ne.s32.totalorder %s107, %s109
      %p116 = scmp.eq.s32.totalorder %s22, 1
      %p117 = por %p115, %p116
      %p118 = scmp.ne.s32.totalorder %s109, %s110
      %p119 = scmp.eq.s32.totalorder %s22, 0
      %p120 = por %p118, %p119
      %p121 = scmp.ne.s32.totalorder %s109, %s110
      %p122 = scmp.eq.s32.totalorder %s23, 1
      %p123 = por %p121, %p122
      %p125 = scmp.ne.s32.totalorder %s110, %s124
      %p126 = scmp.eq.s32.totalorder %s23, 0
      %p127 = por %p125, %p126
      %s129 = sadd.s32 %s128, 1
      %p132 = scmp.eq.s32.totalorder %s17, 1
      %p133 = scmp.ne.s32.totalorder %s128, %s130
      %p134 = scmp.eq.s32.totalorder %s17, 0
      %p135 = por %p133, %p134
      %p136 = scmp.ne.s32.totalorder %s128, %s130
      %p137 = scmp.eq.s32.totalorder %s22, 1
      %p138 = por %p136, %p137
      %p139 = scmp.ne.s32.totalorder %s130, %s131
      %p140 = scmp.eq.s32.totalorder %s22, 0
      %p141 = por %p139, %p140
      %p142 = scmp.ne.s32.totalorder %s130, %s131
      %p143 = scmp.eq.s32.totalorder %s23, 1
      %p144 = por %p142, %p143
      %p146 = scmp.ne.s32.totalorder %s131, %s145
      %p147 = scmp.eq.s32.totalorder %s23, 0
      %p148 = por %p146, %p147
      %s149 = ssub.s32 %s24, %s36
      %s150 = ssub.s32 %s25, %s32
      %s151 = sor.u32 %s149, %s150
      %p152 = scmp.eq.s32.totalorder %s151, 0
      %s154 = sadd.s32 %s153, 1
      %s155 = scalar_select %p152, %s153, %s154
      %p158 = pneg %p152
      %p159 = scmp.eq.s32.totalorder %s17, 1
      %p160 = por %p158, %p159
      %p161 = scmp.ne.s32.totalorder %s153, %s156
      %p162 = scmp.eq.s32.totalorder %s17, 0
      %p163 = por %p161, %p162
      %p164 = scmp.ne.s32.totalorder %s153, %s156
      %p165 = scmp.eq.s32.totalorder %s22, 1
      %p166 = por %p164, %p165
      %p167 = scmp.ne.s32.totalorder %s156, %s157
      %p168 = scmp.eq.s32.totalorder %s22, 0
      %p169 = por %p167, %p168
      %p170 = scmp.ne.s32.totalorder %s156, %s157
      %p171 = scmp.eq.s32.totalorder %s23, 1
      %p172 = por %p170, %p171
      %p174 = scmp.ne.s32.totalorder %s157, %s173
      %p175 = scmp.eq.s32.totalorder %s23, 0
      %p176 = por %p174, %p175
      %p177 = scmp.le.s32.totalorder 1, %s17
      %p178 = scmp.lt.s32.totalorder %s17, 3
      %p179 = pnand %p177, %p178
      %p180 = pneg %p179
      // Predicated region
      $region9: #{tpu_custom_call.1} parent=5 // pred_check
        _
      $region10: #{tpu_custom_call.1} parent=5 // pred_check_branch
        %182 = sbr.rel (%p179) target = $region12
      $region11: #{tpu_custom_call.1} parent=5 // pred_region
        %s183 = ssub.s32 %s17, 1
        // Predicated region
        $region13: #{tpu_custom_call.1} parent=11 // pred_check
          %p184 = pneg %p78
        $region14: #{tpu_custom_call.1} parent=11 // pred_check_branch
          %186 = sbr.rel (%p184) target = $region16
        $region15: #{tpu_custom_call.1} parent=11 // pred_region
          _
        $region16: #{tpu_custom_call.1} parent=11 // pred_fallthru
          _
        // Predicated region
        $region17: #{tpu_custom_call.1} parent=11 // pred_check
          %p187 = pneg %p99
        $region18: #{tpu_custom_call.1} parent=11 // pred_check_branch
          %189 = sbr.rel (%p187) target = $region20
        $region19: #{tpu_custom_call.1} parent=11 // pred_region
          _
        $region20: #{tpu_custom_call.1} parent=11 // pred_fallthru
          _
        // Predicated region
        $region21: #{tpu_custom_call.1} parent=11 // pred_check
          %p190 = pneg %p120
        $region22: #{tpu_custom_call.1} parent=11 // pred_check_branch
          %192 = sbr.rel (%p190) target = $region24
        $region23: #{tpu_custom_call.1} parent=11 // pred_region
          _
        $region24: #{tpu_custom_call.1} parent=11 // pred_fallthru
          _
        // Predicated region
        $region25: #{tpu_custom_call.1} parent=11 // pred_check
          %p193 = pneg %p141
        $region26: #{tpu_custom_call.1} parent=11 // pred_check_branch
          %195 = sbr.rel (%p193) target = $region28
        $region27: #{tpu_custom_call.1} parent=11 // pred_region
          _
        $region28: #{tpu_custom_call.1} parent=11 // pred_fallthru
          _
      $region12: #{tpu_custom_call.1} parent=5 // pred_fallthru
        _
      %p196 = scmp.lt.s32.totalorder %s17, 2
      // Predicated region
      $region29: #{tpu_custom_call.1} parent=5 // pred_check
        %p197 = pneg %p196
      $region30: #{tpu_custom_call.1} parent=5 // pred_check_branch
        %199 = sbr.rel (%p197) target = $region32
      $region31: #{tpu_custom_call.1} parent=5 // pred_region
        // Predicated region
        $region33: #{tpu_custom_call.1} parent=31 // pred_check
          %p200 = pneg %p51
        $region34: #{tpu_custom_call.1} parent=31 // pred_check_branch
          %202 = sbr.rel (%p200) target = $region36
        $region35: #{tpu_custom_call.1} parent=31 // pred_region
          %s203 = sand.u32 %s41, 1
          %s204 = scalar_lea.sflag [#allocation3], %s203
          %s205 = sand.u32 %s41, 1
          %s206 = smul.addr %s205, 64
          %s207 = scalar_lea.vmem [#allocation2], %s206
          %s208 = smul.u32 2, %s25
          %s210 = ssub.s32 1024, 1024
          %211 = vsyncadd %s204, %s210
          %s212 = smul.addr %s24, 8
          %s213 = sadd.s32 %s208, %s212
          %s214 = smul.addr %s213, 128
          %s215 = scalar_lea.hbm %s0, %s214
          %s216 = sshll.u32 %s207, 4
          %s217 = int_to_ptr.vmem [resolvable:$true] %s216
          %222 = dma.hbm_to_vmem [thread:$0]  %s215, 1024, %s217, %s204, 256, 256, 16
        $region36: #{tpu_custom_call.1} parent=31 // pred_fallthru
          _
      $region32: #{tpu_custom_call.1} parent=5 // pred_fallthru
        _
      %p223 = scmp.le.s32.totalorder 1, %s17
      %p224 = scmp.lt.s32.totalorder %s17, 3
      %p225 = pnand %p223, %p224
      %p226 = pneg %p225
      // Predicated region
      $region37: #{tpu_custom_call.1} parent=5 // pred_check
        _
      $region38: #{tpu_custom_call.1} parent=5 // pred_check_branch
        %228 = sbr.rel (%p225) target = $region40
      $region39: #{tpu_custom_call.1} parent=5 // pred_region
        %s229 = ssub.s32 %s17, 1
        %s230 = sand.u32 %s44, 1
        %s231 = scalar_lea.sflag [#allocation3], %s230
        %s232 = sand.u32 %s44, 1
        %s233 = smul.addr %s232, 64
        %s234 = scalar_lea.vmem [#allocation2], %s233
        // Predicated region
        $region41: #{tpu_custom_call.1} parent=39 // pred_check
          %p235 = pneg %p57
        $region42: #{tpu_custom_call.1} parent=39 // pred_check_branch
          %237 = sbr.rel (%p235) target = $region44
        $region43: #{tpu_custom_call.1} parent=39 // pred_region
          %238 = dma.done %s231, 1024
        $region44: #{tpu_custom_call.1} parent=39 // pred_fallthru
          _
        %s239 = sand.u32 %s44, 1
        %s240 = scalar_lea.sflag [#allocation3], %s239
        %s241 = sand.u32 %s44, 1
        %s242 = smul.addr %s241, 64
        %s243 = scalar_lea.vmem [#allocation2], %s242
        %p244 = pneg %p57
        %p245 = pneg %p54
        %p246 = pneg %p78
        %p247 = pneg %p75
        %p248 = pneg %p99
        %p249 = pneg %p96
        %p250 = pneg %p120
        %p251 = pneg %p117
        %p252 = pneg %p141
        %p253 = pneg %p138
        %p254 = pneg %p169
        %p255 = pneg %p166
        %s256 = sand.u32 %s156, 1
        %s257 = scalar_lea.sflag [#allocation4], %s256
        %s258 = sand.u32 %s156, 1
        %s259 = smul.addr %s258, 64
        %s260 = scalar_lea.vmem [#allocation5], %s259
        %s261 = smul.u32 2, %s27
        %s262 = smul.u32 2, %s27
        %v264 = vld [vmem:[%s234] sm:$0xff]
        %v265 = vld [vmem:[%s234 + $0x8] sm:$0xff]
        %v266 = vld [vmem:[%s234 + $0x10] sm:$0xff]
        %v267 = vld [vmem:[%s234 + $0x18] sm:$0xff]
        %v268 = vld [vmem:[%s234 + $0x20] sm:$0xff]
        %v269 = vld [vmem:[%s234 + $0x28] sm:$0xff]
        %v270 = vld [vmem:[%s234 + $0x30] sm:$0xff]
        %v271 = vld [vmem:[%s234 + $0x38] sm:$0xff]
        %v272 = vpack.c.bf16 %v266, %v264
        %v273 = vpack.c.bf16 %v267, %v265
        %v274 = vpack.c.bf16 %v270, %v268
        %v275 = vpack.c.bf16 %v271, %v269
        %v276 = vld [vmem:[%s1] sm:$0xf]
        %v277 = vld [vmem:[%s1 + $0x4] sm:$0xf]
        %v278 = vld [vmem:[%s1 + $0x8] sm:$0xf]
        %v279 = vld [vmem:[%s1 + $0xc] sm:$0xf]
        %v280 = vld [vmem:[%s2] sm:$0xff]
        %v281 = vld [vmem:[%s2 + $0x8] sm:$0xff]
        %v282 = vld [vmem:[%s2 + $0x10] sm:$0xff]
        %v283 = vld [vmem:[%s2 + $0x18] sm:$0xff]
        %285 = vset.pattern.permute.xlu0 0
        %286 = vperm.xlu0 %285, %v280
        %v287 = vpop.permute.xlu0 %286
        %290 = vset.pattern.permute.xlu0 0
        %291 = vperm.xlu0 %290, %v281
        %v292 = vpop.permute.xlu0 %291
        %295 = vset.pattern.permute.xlu0 0
        %296 = vperm.xlu0 %295, %v282
        %v297 = vpop.permute.xlu0 %296
        %300 = vset.pattern.permute.xlu0 0
        %301 = vperm.xlu0 %300, %v283
        %v302 = vpop.permute.xlu0 %301
        %v308 = vunpack.c.l.b16 %v276
        %v309 = vunpack.c.l.b16 %v277
        %v310 = vunpack.c.l.b16 %v278
        %v311 = vunpack.c.l.b16 %v279
        %v312 = vpack.c.b16 %v309, %v308
        %v313 = vpack.c.b16 %v311, %v310
        %vm314 = vcmask 261120
        %v316 = vsel %vm314, %v312, 0
        %v319 = vsel %vm314, %v313, 0
        %321 = vmatprep.subr.bf16.mxu0 0
        %322 = vmatpush1.bf16.msra.mxu0 0
        %323 = vmatprep.subr.bf16.mxu0 0
        %324 = vmatpush1.bf16.msra.mxu0 0
        %325 = vmatprep.subr.bf16.mxu0 0
        %326 = vmatpush1.bf16.msra.mxu0 0
        %327 = vmatprep.subr.bf16.mxu0 0
        %328 = vmatpush1.bf16.msra.mxu0 0
        %329 = vmatprep.subr.bf16.mxu0 0
        %330 = vmatpush1.bf16.msra.mxu0 0
        %331 = vmatprep.subr.bf16.mxu0 0
        %332 = vmatpush1.bf16.msra.mxu0 0
        %333 = vmatprep.subr.bf16.mxu0 %v275
        %334 = vmatpush1.bf16.msra.mxu0 %v274
        %335 = vmatprep.subr.bf16.mxu0 %v273
        %336 = vmatpush1.bf16.msra.mxu0 %v272
        %337 = vmatprep.subr.bf16.mxu0 0
        %338 = vmatpush2.bf16.msra.mxu0 0
        %339 = vmatprep.subr.bf16.mxu0 0
        %340 = vmatpush2.bf16.msra.mxu0 0
        %341 = vmatprep.subr.bf16.mxu0 0
        %342 = vmatpush2.bf16.msra.mxu0 0
        %343 = vmatprep.subr.bf16.mxu0 0
        %344 = vmatpush2.bf16.msra.mxu0 0
        %345 = vmatprep.subr.bf16.mxu0 0
        %346 = vmatpush2.bf16.msra.mxu0 0
        %347 = vmatprep.subr.bf16.mxu0 0
        %348 = vmatpush2.bf16.msra.mxu0 0
        %349 = vmatprep.subr.bf16.mxu0 0
        %350 = vmatpush2.bf16.msra.mxu0 0
        %351 = vmatprep.subr.bf16.mxu0 0
        %352 = vmatpush2.bf16.msra.mxu0 0
        %353 = vmatprep.mubr.bf16.mxu0 0
        %354 = vmatmul.mubr.bf16.gmra.mxu0 %v316
        %v355 = vpop.f32.mrf.mxu0
        %v356 = vadd.f32 %v287, %v355
        %v357 = vpop.f32.mrf.mxu0
        %v358 = vadd.f32 %v287, %v357
        %v359 = vpop.f32.mrf.mxu0
        %v360 = vadd.f32 %v292, %v359
        %v361 = vpop.f32.mrf.mxu0
        %v362 = vadd.f32 %v292, %v361
        %363 = vmatprep.mubr.bf16.mxu0 0
        %364 = vmatmul.mubr.bf16.gmra.mxu0 %v319
        %v365 = vpop.f32.mrf.mxu0
        %v366 = vadd.f32 %v297, %v365
        %v367 = vpop.f32.mrf.mxu0
        %v368 = vadd.f32 %v297, %v367
        %v369 = vpop.f32.mrf.mxu0
        %v370 = vadd.f32 %v302, %v369
        %v371 = vpop.f32.mrf.mxu0
        %v372 = vadd.f32 %v302, %v371
        %373 = vdwg.mxu0
        %v374 = vmax.f32 %v356, 0.0
        %v375 = vmax.f32 %v358, 0.0
        %v376 = vmax.f32 %v360, 0.0
        %v377 = vmax.f32 %v362, 0.0
        %v378 = vmax.f32 %v366, 0.0
        %v379 = vmax.f32 %v368, 0.0
        %v380 = vmax.f32 %v370, 0.0
        %v381 = vmax.f32 %v372, 0.0
        %v382 = vld [vmem:[%s3] sm:$0xf]
        %v383 = vld [vmem:[%s3 + $0x4] sm:$0xf]
        %v384 = vld [vmem:[%s3 + $0x8] sm:$0xf]
        %v385 = vld [vmem:[%s3 + $0xc] sm:$0xf]
        %v386 = vpack.c.bf16 %v376, %v374
        %v387 = vpack.c.bf16 %v377, %v375
        %v388 = vpack.c.bf16 %v380, %v378
        %v389 = vpack.c.bf16 %v381, %v379
        %v390 = vld [vmem:[%s4] sm:$0xff]
        %v391 = vld [vmem:[%s4 + $0x8] sm:$0xff]
        %v392 = vld [vmem:[%s4 + $0x10] sm:$0xff]
        %v393 = vld [vmem:[%s4 + $0x18] sm:$0xff]
        %395 = vset.pattern.permute.xlu0 0
        %396 = vperm.xlu0 %395, %v390
        %v397 = vpop.permute.xlu0 %396
        %400 = vset.pattern.permute.xlu0 0
        %401 = vperm.xlu0 %400, %v391
        %v402 = vpop.permute.xlu0 %401
        %405 = vset.pattern.permute.xlu0 0
        %406 = vperm.xlu0 %405, %v392
        %v407 = vpop.permute.xlu0 %406
        %410 = vset.pattern.permute.xlu0 0
        %411 = vperm.xlu0 %410, %v393
        %v412 = vpop.permute.xlu0 %411
        %v418 = vunpack.c.l.b16 %v382
        %v419 = vunpack.c.l.b16 %v383
        %v420 = vunpack.c.l.b16 %v384
        %v421 = vunpack.c.l.b16 %v385
        %v422 = vpack.c.b16 %v419, %v418
        %v423 = vpack.c.b16 %v421, %v420
        %v425 = vsel %vm314, %v422, 0
        %v428 = vsel %vm314, %v423, 0
        %430 = vmatprep.subr.bf16.mxu0 0
        %431 = vmatpush1.bf16.msra.mxu0 0
        %432 = vmatprep.subr.bf16.mxu0 0
        %433 = vmatpush1.bf16.msra.mxu0 0
        %434 = vmatprep.subr.bf16.mxu0 0
        %435 = vmatpush1.bf16.msra.mxu0 0
        %436 = vmatprep.subr.bf16.mxu0 0
        %437 = vmatpush1.bf16.msra.mxu0 0
        %438 = vmatprep.subr.bf16.mxu0 0
        %439 = vmatpush1.bf16.msra.mxu0 0
        %440 = vmatprep.subr.bf16.mxu0 0
        %441 = vmatpush1.bf16.msra.mxu0 0
        %442 = vmatprep.subr.bf16.mxu0 %v389
        %443 = vmatpush1.bf16.msra.mxu0 %v388
        %444 = vmatprep.subr.bf16.mxu0 %v387
        %445 = vmatpush1.bf16.msra.mxu0 %v386
        %446 = vmatprep.subr.bf16.mxu0 0
        %447 = vmatpush2.bf16.msra.mxu0 0
        %448 = vmatprep.subr.bf16.mxu0 0
        %449 = vmatpush2.bf16.msra.mxu0 0
        %450 = vmatprep.subr.bf16.mxu0 0
        %451 = vmatpush2.bf16.msra.mxu0 0
        %452 = vmatprep.subr.bf16.mxu0 0
        %453 = vmatpush2.bf16.msra.mxu0 0
        %454 = vmatprep.subr.bf16.mxu0 0
        %455 = vmatpush2.bf16.msra.mxu0 0
        %456 = vmatprep.subr.bf16.mxu0 0
        %457 = vmatpush2.bf16.msra.mxu0 0
        %458 = vmatprep.subr.bf16.mxu0 0
        %459 = vmatpush2.bf16.msra.mxu0 0
        %460 = vmatprep.subr.bf16.mxu0 0
        %461 = vmatpush2.bf16.msra.mxu0 0
        %462 = vmatprep.mubr.bf16.mxu0 0
        %463 = vmatmul.mubr.bf16.gmra.mxu0 %v425
        %v464 = vpop.f32.mrf.mxu0
        %v465 = vadd.f32 %v397, %v464
        %v466 = vpop.f32.mrf.mxu0
        %v467 = vadd.f32 %v397, %v466
        %v468 = vpop.f32.mrf.mxu0
        %v469 = vadd.f32 %v402, %v468
        %v470 = vpop.f32.mrf.mxu0
        %v471 = vadd.f32 %v402, %v470
        %472 = vmatprep.mubr.bf16.mxu0 0
        %473 = vmatmul.mubr.bf16.gmra.mxu0 %v428
        %v474 = vpop.f32.mrf.mxu0
        %v475 = vadd.f32 %v407, %v474
        %v476 = vpop.f32.mrf.mxu0
        %v477 = vadd.f32 %v407, %v476
        %v478 = vpop.f32.mrf.mxu0
        %v479 = vadd.f32 %v412, %v478
        %v480 = vpop.f32.mrf.mxu0
        %v481 = vadd.f32 %v412, %v480
        %482 = vdwg.mxu0
        %v483 = vadd.f32 %v465, %v264
        %v484 = vadd.f32 %v467, %v265
        %v485 = vadd.f32 %v469, %v266
        %v486 = vadd.f32 %v471, %v267
        %v487 = vadd.f32 %v475, %v268
        %v488 = vadd.f32 %v477, %v269
        %v489 = vadd.f32 %v479, %v270
        %v490 = vadd.f32 %v481, %v271
        %v491 = vmax.f32 %v483, 0.0
        %v492 = vmax.f32 %v484, 0.0
        %v493 = vmax.f32 %v485, 0.0
        %v494 = vmax.f32 %v486, 0.0
        %v495 = vmax.f32 %v487, 0.0
        %v496 = vmax.f32 %v488, 0.0
        %v497 = vmax.f32 %v489, 0.0
        %v498 = vmax.f32 %v490, 0.0
        %499 = vst [vmem:[%s260] sm:$0xff] %v491
        %500 = vst [vmem:[%s260 + $0x8] sm:$0xff] %v492
        %501 = vst [vmem:[%s260 + $0x10] sm:$0xff] %v493
        %502 = vst [vmem:[%s260 + $0x18] sm:$0xff] %v494
        %503 = vst [vmem:[%s260 + $0x20] sm:$0xff] %v495
        %504 = vst [vmem:[%s260 + $0x28] sm:$0xff] %v496
        %505 = vst [vmem:[%s260 + $0x30] sm:$0xff] %v497
        %506 = vst [vmem:[%s260 + $0x38] sm:$0xff] %v498
        %s507 = sand.u32 %s156, 1
        %s508 = scalar_lea.sflag [#allocation4], %s507
        %s509 = sand.u32 %s156, 1
        %s510 = smul.addr %s509, 64
        %s511 = scalar_lea.vmem [#allocation5], %s510
        // Predicated region
        $region45: #{tpu_custom_call.1} parent=39 // pred_check
          %p512 = pneg %p166
        $region46: #{tpu_custom_call.1} parent=39 // pred_check_branch
          %514 = sbr.rel (%p512) target = $region48
        $region47: #{tpu_custom_call.1} parent=39 // pred_region
          %s515 = smul.u32 2, %s27
          %s517 = ssub.s32 1024, 1024
          %518 = vsyncadd %s508, %s517
          %s519 = smul.addr %s26, 8
          %s520 = sadd.s32 %s515, %s519
          %s521 = smul.addr %s520, 128
          %s522 = scalar_lea.hbm %s5, %s521
          %s523 = sshll.u32 %s511, 4
          %s524 = int_to_ptr.vmem [resolvable:$true] %s523
          %529 = dma.vmem_to_hbm [thread:$0]  %s524, 1024, %s522, %s508, 256, 256, 16
        $region48: #{tpu_custom_call.1} parent=39 // pred_fallthru
          _
      $region40: #{tpu_custom_call.1} parent=5 // pred_fallthru
        _
      %p530 = scmp.le.s32.totalorder 2, %s17
      // Predicated region
      $region49: #{tpu_custom_call.1} parent=5 // pred_check
        %p531 = pneg %p530
      $region50: #{tpu_custom_call.1} parent=5 // pred_check_branch
        %533 = sbr.rel (%p531) target = $region52
      $region51: #{tpu_custom_call.1} parent=5 // pred_region
        %s534 = ssub.s32 %s17, 2
        // Predicated region
        $region53: #{tpu_custom_call.1} parent=51 // pred_check
          %p535 = pneg %p172
        $region54: #{tpu_custom_call.1} parent=51 // pred_check_branch
          %537 = sbr.rel (%p535) target = $region56
        $region55: #{tpu_custom_call.1} parent=51 // pred_region
          %s538 = sand.u32 %s157, 1
          %s539 = scalar_lea.sflag [#allocation4], %s538
          %s540 = sand.u32 %s157, 1
          %s541 = smul.addr %s540, 64
          %s542 = scalar_lea.vmem [#allocation5], %s541
          %543 = dma.done %s539, 1024
        $region56: #{tpu_custom_call.1} parent=51 // pred_fallthru
          _
      $region52: #{tpu_custom_call.1} parent=5 // pred_fallthru
        _
    $region6: #{tpu_custom_call.1} parent=1 // loop_footer
      %s21 = sadd.s32 1, %s17
    $region7: #{tpu_custom_call.1} parent=1 // loop_footer_branch
      %16 = sbr.rel target = $region3
    $region8: #{tpu_custom_call.1} parent=1 // loop_exit
      _
    %544 = vsyncpa [#allocation3], 1
    %s545 = scalar_lea.sflag [#allocation3], 1
    %546 = vsyncpa %s545, 1
    %547 = vsyncpa [#allocation4], 1
    %s548 = scalar_lea.sflag [#allocation4], 1
    %549 = vsyncpa %s548, 1

</llo_original>
